<compile_context>
chip_gen: v7x
topology: tpu7x:2x2x1
jax: 0.10.0
libtpu: 0.0.40
codegen_flags: <defaults>
</compile_context>

<pallas_src>
import functools

import numpy as np
import jax
import jax.numpy as jnp
from jax.experimental import pallas as pl
from jax.experimental.pallas import tpu as pltpu


def _round_up(x, m):
    return ((x + m - 1) // m) * m


def _ceil_div(x, m):
    return (x + m - 1) // m


def _choose_time_tiling(T_in, t_cap):
    """Pick (t_tile, t_grid) so every BlockSpec satisfies the (8, 128) tiling rules.

    Single tile: t_tile = round_up(T_in, 8)  (norm/gate block last-dim == full dim).
    Multi tile:  t_tile = t_cap (a multiple of 128), t_grid = ceil(T_in / t_tile);
                 Pallas clips the partial edge block.
    """
    t_cap = _round_up(max(int(t_cap), 128), 128)
    if T_in <= t_cap:
        return _round_up(max(T_in, 1), 8), 1
    return t_cap, _ceil_div(T_in, t_cap)


# ----------------------------------------------------------------------------
# Kernel 1: per-frame L2 norm over the hidden dimension
#   norm[b, t] = sqrt(sum_d nf[b, t, d]^2)   (torch.linalg.vector_norm, dim=-1)
# grid = (B, t_grid); input block (1, t_tile, D); output is the lane-dense row
# (1, 1, t_tile) of a (B, 1, T_norm) tensor (no 128x lane padding, unmasked vst).
# ----------------------------------------------------------------------------
def _frame_norm_kernel(nf_ref, norm_ref):
    x = nf_ref[0].astype(jnp.float32)                          # (t_tile, D)
    col = jnp.sqrt(jnp.sum(x * x, axis=-1, keepdims=True))     # (t_tile, 1) sublane-major
    # Sublane->lane relayout rides the otherwise-idle XLU; the HBM store is lane-dense.
    norm_ref[0] = jnp.transpose(col)                           # (1, t_tile)


def frame_l2_norm(norm_features, t_tile, t_grid):
    B, T_in, D = norm_features.shape
    T_norm = t_tile * t_grid
    return pl.pallas_call(
        _frame_norm_kernel,
        grid=(B, t_grid),
        in_specs=[pl.BlockSpec((1, t_tile, D), lambda b, t: (b, t, 0))],
        out_specs=pl.BlockSpec((1, 1, t_tile), lambda b, t: (b, 0, t)),
        out_shape=jax.ShapeDtypeStruct((B, 1, T_norm), jnp.float32),
        # TODO(synk): on v7x, use pltpu.CORE_PARALLEL on the leading axis so the HBM
        # stream is sharded across both TensorCores; plain "parallel" is kept because
        # it is safe on every TPU generation.
        compiler_params=pltpu.CompilerParams(
            dimension_semantics=("parallel", "parallel")),
    )(norm_features)


# ----------------------------------------------------------------------------
# Kernel 2: zero masked-out frames
#   out[b, t, :] = feat[b, t, :] * gate[b, t]     (gate is 0.0 / 1.0)
# gate is precomputed in the glue from the per-frame norms (no SMEM scalars, no
# duplicated threshold math in the kernel).  Pure HBM streaming.
# ----------------------------------------------------------------------------
def _gate_features_kernel(gate_ref, feat_ref, out_ref):
    g = jnp.transpose(gate_ref[0])                             # (1,t_tile) -> (t_tile,1)
    out_ref[0] = (feat_ref[0] * g).astype(out_ref.dtype)


def gate_features(features, gate, t_tile, t_grid):
    B, T_in, D = features.shape
    return pl.pallas_call(
        _gate_features_kernel,
        grid=(B, t_grid),
        in_specs=[
            pl.BlockSpec((1, 1, t_tile), lambda b, t: (b, 0, t)),   # (B,1,T_norm) gate
            pl.BlockSpec((1, t_tile, D), lambda b, t: (b, t, 0)),   # (B,T_in,D) features
        ],
        out_specs=pl.BlockSpec((1, t_tile, D), lambda b, t: (b, t, 0)),
        out_shape=jax.ShapeDtypeStruct((B, T_in, D), features.dtype),
        # TODO(synk): input_output_aliases={1: 0} would halve peak HBM footprint, but
        # it also needs donate_argnums at the jit boundary; without donation XLA
        # inserts a defensive copy that costs more than it saves, so it is omitted.
        compiler_params=pltpu.CompilerParams(
            dimension_semantics=("parallel", "parallel")),
    )(gate, features)


# ----------------------------------------------------------------------------
# Per-sample masked percentiles (np.percentile 'linear' interpolation) over the valid
# frames only, via two small lax.top_k calls instead of a full sort (shrinks the
# serial region between the two streaming Pallas kernels).  Plain JAX inside the jit.
# ----------------------------------------------------------------------------
def _masked_percentiles(norms2d, frame_lens, T_in):
    T_cols = norms2d.shape[1]
    pos_idx = jnp.arange(T_cols, dtype=jnp.int32)[None, :]
    valid = pos_idx < frame_lens[:, None]

    k = min(int(np.ceil(0.01 * max(T_in - 1, 1))) + 1, T_cols)
    # k smallest valid values, ascending (invalid -> +inf, pushed to the end).
    bottom = -jax.lax.top_k(jnp.where(valid, -norms2d, -jnp.inf), k)[0]
    # k largest valid values, descending (invalid -> -inf, pushed to the end).
    top = jax.lax.top_k(jnp.where(valid, norms2d, -jnp.inf), k)[0]

    nm1 = jnp.maximum(frame_lens - 1, 0)            # guard zero-length samples
    nm1_f = nm1.astype(jnp.float32)

    def interp(vals, ranks_lo, ranks_hi, frac):
        v_lo = jnp.take_along_axis(vals, ranks_lo[:, None], axis=-1)[:, 0]
        v_hi = jnp.take_along_axis(vals, ranks_hi[:, None], axis=-1)[:, 0]
        return v_lo + (v_hi - v_lo) * frac

    # p1: ascending index pos = 0.01 * (n - 1), taken from the bottom-k.
    pos1 = 0.01 * nm1_f
    lo1 = jnp.floor(pos1).astype(jnp.int32)
    hi1 = jnp.ceil(pos1).astype(jnp.int32)
    p1 = interp(bottom, lo1, hi1, pos1 - lo1.astype(jnp.float32))

    # p99: ascending index pos = 0.99 * (n - 1); rank from the top r = (n-1) - index.
    pos99 = 0.99 * nm1_f
    lo99 = jnp.floor(pos99).astype(jnp.int32)
    hi99 = jnp.ceil(pos99).astype(jnp.int32)
    p99 = interp(top, nm1 - lo99, nm1 - hi99, pos99 - lo99.astype(jnp.float32))
    return p1, p99


# ----------------------------------------------------------------------------
# One fused device program for the whole batch (both Pallas kernels + glue).
# ----------------------------------------------------------------------------
@functools.partial(jax.jit, static_argnames=("threshold", "strategy", "t_tile", "t_grid"))
def _device_forward(features, norm_features, frame_lens, *, threshold, strategy,
                    t_tile, t_grid):
    B, T_in, D = features.shape

    norms = frame_l2_norm(norm_features, t_tile, t_grid)        # (B, 1, T_norm) Pallas
    norms2d = norms[:, 0, :]                                    # (B, T_norm) lane-dense

    if strategy == "relative":
        p1, p99 = _masked_percentiles(norms2d, frame_lens, T_in)
        rng = p99 - p1
        # NOTE: the reference divides by (p99 - p1) unguarded (inf/NaN on a degenerate
        # or empty utterance).  Here a degenerate range yields inv = 0 -> all-False
        # mask -> fully-zeroed utterance: an intentional, documented divergence.
        ok = jnp.isfinite(rng) & (rng != 0.0)
        inv = jnp.where(ok, 1.0 / jnp.where(ok, rng, 1.0), 0.0)
        nmin = jnp.where(jnp.isfinite(p1), p1, 0.0)
    else:                                                       # 'absolute'
        nmin = jnp.zeros((B,), jnp.float32)
        inv = jnp.ones((B,), jnp.float32)

    nrel_full = (norms2d - nmin[:, None]) * inv[:, None]        # (B, T_norm)
    mask_full = nrel_full > jnp.float32(threshold)
    gate = mask_full.astype(features.dtype)[:, None, :]         # (B, 1, T_norm), 0/1

    out_feat = gate_features(features, gate, t_tile, t_grid)    # (B, T_in, D)  Pallas
    return out_feat, nrel_full[:, :T_in], mask_full[:, :T_in]


# ----------------------------------------------------------------------------
# Host-side glue mirroring mask_to_segment / trim_segment (data-dependent,
# variable-length outputs -> numpy, same as the reference implementation).
# ----------------------------------------------------------------------------
def mask_to_segment(mask):
    segments_list = []
    for m in mask:
        valid_mask_ext = np.concatenate([np.zeros(1), m * 1.0, np.zeros(1)], 0)
        turning = valid_mask_ext[1:] - valid_mask_ext[:-1]
        turn_on = np.nonzero(turning > 0)[0]
        turn_off = np.nonzero(-turning > 0)[0]
        segments = np.array([[turn_on[i], turn_off[i]]
                             for i in range(len(turn_on))])
        segments_list.append(segments)
    return segments_list


def trim_segment(segments, wavs, *, zero_pad, buffer_pad, wav_ft_sr,
                 min_segment_len, silence_threshold):
    trimmed_segments_list = []
    for seg, wav in zip(segments, wavs):
        trimmed_segments = []
        for si, ei in seg:
            wav_trimmed = wav[zero_pad + buffer_pad:]
            piece = wav_trimmed[wav_ft_sr * si:wav_ft_sr * ei]
            if (ei - si >= min_segment_len
                    and piece.size > 0
                    and np.abs(piece).mean() > silence_threshold):
                trimmed_segments.append([si, ei])
        trimmed_segments_list.append(np.array(trimmed_segments))
    return trimmed_segments_list


# ----------------------------------------------------------------------------
# Forward pass (post-backbone part of SDHuBERTSegmenter.forward), batched.
# ----------------------------------------------------------------------------
def sdhubert_segment(features, norm_features, wavs_np, lengths,
                     *, normcut_threshold=0.1, normcut_strategy='relative',
                     silence_threshold=0.02, min_segment_len=2, zero_pad=0,
                     t_cap=1024):
    wav_sr, ft_sr = 16000, 50
    wav_ft_sr = wav_sr // ft_sr            # 320
    buffer_pad = wav_ft_sr // 2            # 160

    B, T_in, D = features.shape
    frame_lens = np.array([min(l // wav_ft_sr, T_in) for l in lengths], np.int32)
    max_frames = int(frame_lens.max()) if B > 0 else 0

    # No host-side padding of the (B, T, D) tensors: the grid ceil-divides T and the
    # partial edge block is clipped by Pallas (its garbage is masked downstream).
    t_tile, t_grid = _choose_time_tiling(T_in, t_cap)

    out_feat, nrel, mask = _device_forward(
        features, norm_features, jnp.asarray(frame_lens),
        threshold=float(normcut_threshold), strategy=normcut_strategy,
        t_tile=int(t_tile), t_grid=int(t_grid))

    # Single batched device -> host transfer, restricted to frames the host uses.
    if max_frames < T_in:
        out_feat_h = out_feat[:, :max_frames]
        nrel_h = nrel[:, :max_frames]
        mask_h = mask[:, :max_frames]
    else:
        out_feat_h, nrel_h, mask_h = out_feat, nrel, mask
    out_feat_np, nrel_np, mask_np = jax.device_get((out_feat_h, nrel_h, mask_h))

    results = []
    for idx in range(B):
        Tv = int(frame_lens[idx])
        states = out_feat_np[idx, :Tv]
        norm_np = nrel_np[idx, :Tv]
        valid_mask = mask_np[idx, :Tv]

        segments = mask_to_segment([valid_mask])[0]
        trimmed_segments = trim_segment(
            [segments], [wavs_np[idx]],
            zero_pad=zero_pad, buffer_pad=buffer_pad, wav_ft_sr=wav_ft_sr,
            min_segment_len=min_segment_len,
            silence_threshold=silence_threshold)[0]

        results.append({'segments': trimmed_segments,
                        'features': states,
                        'mask': valid_mask,
                        'norm': norm_np})
    return results, (out_feat, nrel, mask)


if __name__ == "__main__":
    master_key = jax.random.PRNGKey(0)

    def run_case(case_key, B, D, lengths, t_cap):
        kw, kh9, kh10 = jax.random.split(case_key, 3)
        max_len = max(lengths)
        T_frames = max_len // 320

        # Synthetic normalized waveforms (mirrors preprocess_wav normalization),
        # padded batch like nn.utils.rnn.pad_sequence.
        wavs_np = np.zeros((B, max_len), np.float32)
        for i, L in enumerate(lengths):
            w = np.asarray(jax.random.normal(jax.random.fold_in(kw, i), (L,),
                                             dtype=jnp.float32))
            w = (w - w.mean()) / w.std()
            wavs_np[i, :L] = w

        # TODO(synk): SD-HuBERT backbone (load_model(ckpt_path) + Wav2Vec2Processor)
        # is an external checkpoint with no in-script definition; hidden states for
        # layer=9 and normcut_layer=10 are synthesized deterministically instead.
        hidden_l9 = jax.random.normal(kh9, (B, T_frames + 1, D), dtype=jnp.float32)
        hidden_l10 = jax.random.normal(kh10, (B, T_frames + 1, D), dtype=jnp.float32)

        features = hidden_l9[:, 1:]            # drop CLS token, as in forward()
        norm_features = hidden_l10[:, 1:]

        results, dev_outs = sdhubert_segment(
            features, norm_features, wavs_np, lengths,
            normcut_threshold=0.1, normcut_strategy='relative',
            silence_threshold=0.02, min_segment_len=2, zero_pad=0, t_cap=t_cap)
        jax.block_until_ready(dev_outs)

        # Numpy reference check of the per-sample post-backbone math.
        feats_np = np.asarray(features)
        nfeats_np = np.asarray(norm_features)
        for idx, L in enumerate(lengths):
            Tv = L // 320
            ref_states = feats_np[idx, :Tv].copy()
            ref_norm = np.linalg.norm(nfeats_np[idx, :Tv], ord=2, axis=-1)
            nmin = np.percentile(ref_norm, 1)
            nmax = np.percentile(ref_norm, 99)
            ref_nrel = (ref_norm - nmin) / (nmax - nmin)
            ref_mask = ref_nrel > 0.1
            ref_states[~ref_mask] = 0.0

            r = results[idx]
            assert r['features'].shape == (Tv, D)
            assert r['norm'].shape == (Tv,)
            assert r['mask'].shape == (Tv,)
            assert np.allclose(r['norm'], ref_nrel, rtol=1e-4, atol=1e-4)
            # Threshold decisions may legitimately differ on frames whose nrel sits
            # within float32 error of the threshold; require equality elsewhere.
            clear = np.abs(ref_nrel - 0.1) > 1e-3
            assert np.array_equal(r['mask'][clear], ref_mask[clear])
            agree = r['mask'] == ref_mask
            assert np.allclose(r['features'][agree], ref_states[agree],
                               rtol=1e-5, atol=1e-5)
            assert np.all(r['features'][~r['mask']] == 0.0)

    # Case 1: tiny shapes, single time tile.
    run_case(jax.random.fold_in(master_key, 0), B=2, D=128,
             lengths=[5120, 3840], t_cap=1024)
    # Case 2: multi-tile time axis with a partial edge block (T=200 frames, t_tile=128).
    run_case(jax.random.fold_in(master_key, 1), B=2, D=128,
             lengths=[64000, 48000], t_cap=128)

    print("KERNEL_OK")
</pallas_src>

<mosaic_0001>
module attributes {stable_mosaic.version = 11 : i64} {
  func.func @_frame_norm_kernel(%arg0: i32, %arg1: i32, %arg2: memref<1x16x128xf32, #tpu.memory_space<vmem>>, %arg3: memref<1x1x16xf32, #tpu.memory_space<vmem>>) attributes {dimension_semantics = [#tpu.dimension_semantics<parallel>, #tpu.dimension_semantics<parallel>], iteration_bounds = array<i64: 2, 1>, scalar_prefetch = 0 : i64, scratch_operands = 0 : i64, tpu.core_type = #tpu.core_type<tc>, window_params = [{transform_indices = @transform_0, window_bounds = array<i64: 1, 16, 128>}, {transform_indices = @transform_1, window_bounds = array<i64: 1, 1, 16>}]} {
    %c0 = arith.constant 0 : index
    %c0_0 = arith.constant 0 : index
    %c0_1 = arith.constant 0 : index
    %0 = vector.load %arg2[%c0, %c0_0, %c0_1] : memref<1x16x128xf32, #tpu.memory_space<vmem>>, vector<1x16x128xf32>
    %1 = vector.shape_cast %0 : vector<1x16x128xf32> to vector<16x128xf32>
    %2 = arith.mulf %1, %1 : vector<16x128xf32>
    %cst = arith.constant dense<0.000000e+00> : vector<16xf32>
    %3 = vector.multi_reduction <add>, %2, %cst [1] : vector<16x128xf32> to vector<16xf32>
    %4 = vector.shape_cast %3 : vector<16xf32> to vector<16x1xf32>
    %5 = math.sqrt %4 : vector<16x1xf32>
    %6 = tpu.transpose %5, [1, 0] : vector<16x1xf32> -> vector<1x16xf32>
    %c0_2 = arith.constant 0 : index
    %c0_3 = arith.constant 0 : index
    %c0_4 = arith.constant 0 : index
    %7 = vector.load %arg3[%c0_2, %c0_3, %c0_4] : memref<1x1x16xf32, #tpu.memory_space<vmem>>, vector<1x1x16xf32>
    %8 = vector.shape_cast %7 : vector<1x1x16xf32> to vector<1x16xf32>
    %9 = vector.shape_cast %6 : vector<1x16xf32> to vector<1x1x16xf32>
    tpu.vector_store %arg3[%c0_2, %c0_3, %c0_4], %9 {strides = array<i32>} : memref<1x1x16xf32, #tpu.memory_space<vmem>>, vector<1x1x16xf32>,
    return
  }
  func.func @transform_0(%arg0: i32, %arg1: i32) -> (i32, i32, i32) {
    %c0_i32 = arith.constant 0 : i32
    %c0_i32_0 = arith.constant 0 : i32
    return %arg0, %arg1, %c0_i32 : i32, i32, i32
  }
  func.func @transform_1(%arg0: i32, %arg1: i32) -> (i32, i32, i32) {
    %c0_i32 = arith.constant 0 : i32
    %c0_i32_0 = arith.constant 0 : i32
    return %arg0, %c0_i32, %arg1 : i32, i32, i32
  }
}

module attributes {stable_mosaic.version = 11 : i64} {
  func.func @_gate_features_kernel(%arg0: i32, %arg1: i32, %arg2: memref<1x1x16xf32, #tpu.memory_space<vmem>>, %arg3: memref<1x16x128xf32, #tpu.memory_space<vmem>>, %arg4: memref<1x16x128xf32, #tpu.memory_space<vmem>>) attributes {dimension_semantics = [#tpu.dimension_semantics<parallel>, #tpu.dimension_semantics<parallel>], iteration_bounds = array<i64: 2, 1>, scalar_prefetch = 0 : i64, scratch_operands = 0 : i64, tpu.core_type = #tpu.core_type<tc>, window_params = [{transform_indices = @transform_0, window_bounds = array<i64: 1, 1, 16>}, {transform_indices = @transform_1, window_bounds = array<i64: 1, 16, 128>}, {transform_indices = @transform_2, window_bounds = array<i64: 1, 16, 128>}]} {
    %c0 = arith.constant 0 : index
    %c0_0 = arith.constant 0 : index
    %c0_1 = arith.constant 0 : index
    %0 = vector.load %arg2[%c0, %c0_0, %c0_1] : memref<1x1x16xf32, #tpu.memory_space<vmem>>, vector<1x1x16xf32>
    %1 = vector.shape_cast %0 : vector<1x1x16xf32> to vector<1x16xf32>
    %2 = tpu.transpose %1, [1, 0] : vector<1x16xf32> -> vector<16x1xf32>
    %c0_2 = arith.constant 0 : index
    %c0_3 = arith.constant 0 : index
    %c0_4 = arith.constant 0 : index
    %3 = vector.load %arg3[%c0_2, %c0_3, %c0_4] : memref<1x16x128xf32, #tpu.memory_space<vmem>>, vector<1x16x128xf32>
    %4 = vector.shape_cast %3 : vector<1x16x128xf32> to vector<16x128xf32>
    %5 = vector.broadcast %2 : vector<16x1xf32> to vector<16x128xf32>
    %6 = arith.mulf %4, %5 : vector<16x128xf32>
    %c0_5 = arith.constant 0 : index
    %c0_6 = arith.constant 0 : index
    %c0_7 = arith.constant 0 : index
    %7 = vector.load %arg4[%c0_5, %c0_6, %c0_7] : memref<1x16x128xf32, #tpu.memory_space<vmem>>, vector<1x16x128xf32>
    %8 = vector.shape_cast %7 : vector<1x16x128xf32> to vector<16x128xf32>
    %9 = vector.shape_cast %6 : vector<16x128xf32> to vector<1x16x128xf32>
    tpu.vector_store %arg4[%c0_5, %c0_6, %c0_7], %9 {strides = array<i32>} : memref<1x16x128xf32, #tpu.memory_space<vmem>>, vector<1x16x128xf32>,
    return
  }
  func.func @transform_0(%arg0: i32, %arg1: i32) -> (i32, i32, i32) {
    %c0_i32 = arith.constant 0 : i32
    %c0_i32_0 = arith.constant 0 : i32
    return %arg0, %c0_i32, %arg1 : i32, i32, i32
  }
  func.func @transform_1(%arg0: i32, %arg1: i32) -> (i32, i32, i32) {
    %c0_i32 = arith.constant 0 : i32
    %c0_i32_0 = arith.constant 0 : i32
    return %arg0, %arg1, %c0_i32 : i32, i32, i32
  }
  func.func @transform_2(%arg0: i32, %arg1: i32) -> (i32, i32, i32) {
    %c0_i32 = arith.constant 0 : i32
    %c0_i32_0 = arith.constant 0 : i32
    return %arg0, %arg1, %c0_i32 : i32, i32, i32
  }
}

</mosaic_0001>

<llo_original>
// kernel: _device_forward.2
$region0: #{_device_forward.2}
  #allocation0 [shape = 'u32[]', space=smem, size = 0x4, offset = 0x4, fixed_abs, tag = 'smem constant byte address 0x4 - core index']
  #allocation1 [shape = 'u32[144,128]{1,0:T(1,128)}', space=vmem, size = 0x12000, scoped, tag = 'internal scratch']
  %s0 = inlined_call_operand.hbm [shape: f32[2,16,128], index: 0, kind: input, shape index: {}]
  %s1 = inlined_call_operand.vmem [shape: f32[2,1,16], index: 1, kind: output, shape index: {}]
  %s2 = sld [smem:[#allocation0]]
  $region41: #{_device_forward.2} parent=0
    _
  %s4 = ssub.s32 1, %s2
  %s5 = scalar_select 0, %s4, %s2
  $region1: #{_device_forward.2} parent=0
    #allocation2 [shape = 'u8[16384]{0}', space=vmem, size = 0x4000, scoped, tag = 'input window, operand 0']
    #allocation3 [shape = 's32[2]{0}', space=sflag, size = 0x8, scoped, tag = 'scoped memory for _device_forward.2']
    %6 = vsyncpa [#allocation3], 0
    %s7 = scalar_lea.sflag [#allocation3], 1
    %8 = vsyncpa %s7, 0
    loop: start=0, step=1, limit=4
    $region2: #{_device_forward.2} parent=1 // loop_pre_header
      _
    $region3: #{_device_forward.2} parent=1 // loop_header
      %s10 = sphi 0, %s14
      %p11 = scmp.ge.s32.totalorder %s10, 4
      %s17 = sphi 0, %s29
      %s18 = sphi 0, %s25
      %s19 = sphi 0, %s17
      %s20 = sphi 0, %s18
      %s21 = sphi 0, %s19
      %s22 = sphi 0, %s20
      %s34 = sphi 0, %s36
      %s37 = sphi 0, %s34
      %s38 = sphi 0, %s37
      %s54 = sphi 0, %s38
      %s62 = sphi 0, %s64
      %s65 = sphi 0, %s62
      %s66 = sphi 0, %s65
      %s82 = sphi 0, %s66
    $region4: #{_device_forward.2} parent=1 // loop_header_branch
      %13 = sbr.rel (%p11) target = $region8
    $region5: #{_device_forward.2} parent=1 // loop_body
      %s15 = ssub.s32 %s10, 1
      %s16 = ssub.s32 %s10, 2
      %s23 = sadd.s32 1, %s18
      %p24 = scmp.ge.s32.totalorder %s23, 1
      %s25 = scalar_select %p24, 0, %s23
      %s26 = sadd.s32 1, %s17
      %s27 = scalar_select %p24, %s26, %s17
      %p28 = scmp.ge.s32.totalorder %s27, 2
      %s29 = scalar_select %p28, 0, %s27
      %s30 = ssub.s32 %s17, %s29
      %s31 = ssub.s32 %s18, %s25
      %s32 = sor.u32 %s30, %s31
      %p33 = scmp.eq.s32.totalorder %s32, 0
      %s35 = sadd.s32 %s34, 1
      %s36 = scalar_select %p33, %s34, %s35
      %p39 = pneg %p33
      %p40 = scmp.eq.s32.totalorder %s10, 1
      %p41 = por %p39, %p40
      %p42 = scmp.ne.s32.totalorder %s34, %s37
      %p43 = scmp.eq.s32.totalorder %s10, 0
      %p44 = por %p42, %p43
      %p45 = scmp.ne.s32.totalorder %s34, %s37
      %p46 = scmp.eq.s32.totalorder %s15, 1
      %p47 = por %p45, %p46
      %p48 = scmp.ne.s32.totalorder %s37, %s38
      %p49 = scmp.eq.s32.totalorder %s15, 0
      %p50 = por %p48, %p49
      %p51 = scmp.ne.s32.totalorder %s37, %s38
      %p52 = scmp.eq.s32.totalorder %s16, 1
      %p53 = por %p51, %p52
      %p55 = scmp.ne.s32.totalorder %s38, %s54
      %p56 = scmp.eq.s32.totalorder %s16, 0
      %p57 = por %p55, %p56
      %s58 = ssub.s32 %s17, %s29
      %s59 = ssub.s32 %s18, %s25
      %s60 = sor.u32 %s58, %s59
      %p61 = scmp.eq.s32.totalorder %s60, 0
      %s63 = sadd.s32 %s62, 1
      %s64 = scalar_select %p61, %s62, %s63
      %p67 = pneg %p61
      %p68 = scmp.eq.s32.totalorder %s10, 1
      %p69 = por %p67, %p68
      %p70 = scmp.ne.s32.totalorder %s62, %s65
      %p71 = scmp.eq.s32.totalorder %s10, 0
      %p72 = por %p70, %p71
      %p73 = scmp.ne.s32.totalorder %s62, %s65
      %p74 = scmp.eq.s32.totalorder %s15, 1
      %p75 = por %p73, %p74
      %p76 = scmp.ne.s32.totalorder %s65, %s66
      %p77 = scmp.eq.s32.totalorder %s15, 0
      %p78 = por %p76, %p77
      %p79 = scmp.ne.s32.totalorder %s65, %s66
      %p80 = scmp.eq.s32.totalorder %s16, 1
      %p81 = por %p79, %p80
      %p83 = scmp.ne.s32.totalorder %s66, %s82
      %p84 = scmp.eq.s32.totalorder %s16, 0
      %p85 = por %p83, %p84
      %p86 = scmp.le.s32.totalorder 1, %s10
      %p87 = scmp.lt.s32.totalorder %s10, 3
      %p88 = pnand %p86, %p87
      %p89 = pneg %p88
      // Predicated region
      $region9: #{_device_forward.2} parent=5 // pred_check
        _
      $region10: #{_device_forward.2} parent=5 // pred_check_branch
        %91 = sbr.rel (%p88) target = $region12
      $region11: #{_device_forward.2} parent=5 // pred_region
        %s92 = ssub.s32 %s10, 1
      $region12: #{_device_forward.2} parent=5 // pred_fallthru
        _
      %p93 = scmp.lt.s32.totalorder %s10, 2
      // Predicated region
      $region13: #{_device_forward.2} parent=5 // pred_check
        %p94 = pneg %p93
      $region14: #{_device_forward.2} parent=5 // pred_check_branch
        %96 = sbr.rel (%p94) target = $region16
      $region15: #{_device_forward.2} parent=5 // pred_region
        // Predicated region
        $region17: #{_device_forward.2} parent=15 // pred_check
          %p97 = pneg %p44
        $region18: #{_device_forward.2} parent=15 // pred_check_branch
          %99 = sbr.rel (%p97) target = $region20
        $region19: #{_device_forward.2} parent=15 // pred_region
          %s100 = sand.u32 %s34, 1
          %s101 = scalar_lea.sflag [#allocation3], %s100
          %s102 = sand.u32 %s34, 1
          %s103 = smul.addr %s102, 16
          %s104 = scalar_lea.vmem [#allocation2], %s103
          %s105 = smul.u32 2, %s18
          %s107 = ssub.s32 256, 256
          %108 = vsyncadd %s101, %s107
          %s109 = smul.addr %s17, 2
          %s110 = sadd.s32 %s105, %s109
          %s111 = smul.addr %s110, 128
          %s112 = scalar_lea.hbm %s0, %s111
          %s113 = sshll.u32 %s104, 4
          %s114 = int_to_ptr.vmem [resolvable:$true] %s113
          %119 = dma.hbm_to_vmem [thread:$0]  %s112, 256, %s114, %s101, 128, 128, 8
        $region20: #{_device_forward.2} parent=15 // pred_fallthru
          _
      $region16: #{_device_forward.2} parent=5 // pred_fallthru
        _
      %p120 = scmp.le.s32.totalorder 1, %s10
      %p121 = scmp.lt.s32.totalorder %s10, 3
      %p122 = pnand %p120, %p121
      %p123 = pneg %p122
      // Predicated region
      $region21: #{_device_forward.2} parent=5 // pred_check
        _
      $region22: #{_device_forward.2} parent=5 // pred_check_branch
        %125 = sbr.rel (%p122) target = $region24
      $region23: #{_device_forward.2} parent=5 // pred_region
        %s126 = ssub.s32 %s10, 1
        %s127 = sand.u32 %s37, 1
        %s128 = scalar_lea.sflag [#allocation3], %s127
        %s129 = sand.u32 %s37, 1
        %s130 = smul.addr %s129, 16
        %s131 = scalar_lea.vmem [#allocation2], %s130
        // Predicated region
        $region25: #{_device_forward.2} parent=23 // pred_check
          %p132 = pneg %p50
        $region26: #{_device_forward.2} parent=23 // pred_check_branch
          %134 = sbr.rel (%p132) target = $region28
        $region27: #{_device_forward.2} parent=23 // pred_region
          %135 = dma.done %s128, 256
        $region28: #{_device_forward.2} parent=23 // pred_fallthru
          _
        %s136 = sand.u32 %s37, 1
        %s137 = scalar_lea.sflag [#allocation3], %s136
        %s138 = sand.u32 %s37, 1
        %s139 = smul.addr %s138, 16
        %s140 = scalar_lea.vmem [#allocation2], %s139
        %p141 = pneg %p50
        %p142 = pneg %p47
        %p143 = pneg %p78
        %p144 = pneg %p75
        %p145 = scmp.lt.s32.totalorder %s19, 1
        %s146 = scalar_select %p145, %s19, 1
        %p147 = scmp.lt.s32.totalorder %s20, 0
        %s148 = scalar_select %p147, %s20, 0
        %s149 = sadd.s32 %s148, %s146
        %s150 = scalar_lea.vmem %s1, %s149
        %s151 = smul.u32 2, %s20
        %p152 = scmp.lt.s32.totalorder %s19, 1
        %s153 = scalar_select %p152, %s19, 1
        %p154 = scmp.lt.s32.totalorder %s20, 0
        %s155 = scalar_select %p154, %s20, 0
        %s156 = sadd.s32 %s155, %s153
        %s157 = scalar_lea.vmem %s1, %s156
        %v158 = vld [vmem:[%s131] sm:$0xff]
        %v159 = vld [vmem:[%s131 + $0x8] sm:$0xff]
        %v160 = vmul.f32 %v158, %v158
        %v161 = vmul.f32 %v159, %v159
        %162 = vadd.xlane.f32.xlu0 %v160
        %v163 = vpop.xlane.xlu0 %162
        %164 = vadd.xlane.f32.xlu0 %v161
        %v165 = vpop.xlane.xlu0 %164
        %v166 = vrsqrt.pop %v163
        %v167 = vmul.f32 %v163, %v166
        %vm168 = vcmp.eq.f32.partialorder %v163, inf
        %v169 = vsel %vm168, %v163, %v167
        %vm170 = vcmp.eq.f32.partialorder %v163, 0.0
        %v171 = vand.u32 %v163, 2147483648
        %v172 = vsel %vm170, %v171, %v169
        %v173 = vrsqrt.pop %v165
        %v174 = vmul.f32 %v165, %v173
        %vm175 = vcmp.eq.f32.partialorder %v165, inf
        %v176 = vsel %vm175, %v165, %v174
        %vm177 = vcmp.eq.f32.partialorder %v165, 0.0
        %v178 = vand.u32 %v165, 2147483648
        %v179 = vsel %vm177, %v178, %v176
        %180 = vxpose.xlu0.b32.start [1/16] %v172, 128
        %181 = vxpose.xlu0.b32.cont [2/16] %v179, 128
        %182 = vxpose.xlu0.b32.cont [3/16] 0.0, 128
        %183 = vxpose.xlu0.b32.cont [4/16] 0.0, 128
        %184 = vxpose.xlu0.b32.cont [5/16] 0.0, 128
        %185 = vxpose.xlu0.b32.cont [6/16] 0.0, 128
        %186 = vxpose.xlu0.b32.cont [7/16] 0.0, 128
        %187 = vxpose.xlu0.b32.cont [8/16] 0.0, 128
        %188 = vxpose.xlu0.b32.cont [9/16] 0.0, 128
        %189 = vxpose.xlu0.b32.cont [10/16] 0.0, 128
        %190 = vxpose.xlu0.b32.cont [11/16] 0.0, 128
        %191 = vxpose.xlu0.b32.cont [12/16] 0.0, 128
        %192 = vxpose.xlu0.b32.cont [13/16] 0.0, 128
        %193 = vxpose.xlu0.b32.cont [14/16] 0.0, 128
        %194 = vxpose.xlu0.b32.cont [15/16] 0.0, 128
        %195 = vxpose.xlu0.b32.end [16/16] 0.0, 128
        %v196 = vpop.trf.xlu0
        %v197 = vpop.trf.xlu0
        %v198 = vpop.trf.xlu0
        %v199 = vpop.trf.xlu0
        %v200 = vpop.trf.xlu0
        %v201 = vpop.trf.xlu0
        %v202 = vpop.trf.xlu0
        %v203 = vpop.trf.xlu0
        %v204 = vpop.trf.xlu0
        %v205 = vpop.trf.xlu0
        %v206 = vpop.trf.xlu0
        %v207 = vpop.trf.xlu0
        %v208 = vpop.trf.xlu0
        %v209 = vpop.trf.xlu0
        %v210 = vpop.trf.xlu0
        %v211 = vpop.trf.xlu0
        %vm212 = vcmask 122880
        %213 = vst.msk [vmem:[%s157] sm:$0x1] %vm212, %v196
        %p214 = scmp.lt.s32.totalorder %s19, 1
        %s215 = scalar_select %p214, %s19, 1
        %p216 = scmp.lt.s32.totalorder %s20, 0
        %s217 = scalar_select %p216, %s20, 0
        %s218 = sadd.s32 %s217, %s215
        %s219 = scalar_lea.vmem %s1, %s218
        // Predicated region
        $region29: #{_device_forward.2} parent=23 // pred_check
          %p220 = pneg %p75
        $region30: #{_device_forward.2} parent=23 // pred_check_branch
          %222 = sbr.rel (%p220) target = $region32
        $region31: #{_device_forward.2} parent=23 // pred_region
          _
        $region32: #{_device_forward.2} parent=23 // pred_fallthru
          _
      $region24: #{_device_forward.2} parent=5 // pred_fallthru
        _
      %p223 = scmp.le.s32.totalorder 2, %s10
      // Predicated region
      $region33: #{_device_forward.2} parent=5 // pred_check
        %p224 = pneg %p223
      $region34: #{_device_forward.2} parent=5 // pred_check_branch
        %226 = sbr.rel (%p224) target = $region36
      $region35: #{_device_forward.2} parent=5 // pred_region
        %s227 = ssub.s32 %s10, 2
        // Predicated region
        $region37: #{_device_forward.2} parent=35 // pred_check
          %p228 = pneg %p81
        $region38: #{_device_forward.2} parent=35 // pred_check_branch
          %230 = sbr.rel (%p228) target = $region40
        $region39: #{_device_forward.2} parent=35 // pred_region
          %p231 = scmp.lt.s32.totalorder %s21, 1
          %s232 = scalar_select %p231, %s21, 1
          %p233 = scmp.lt.s32.totalorder %s22, 0
          %s234 = scalar_select %p233, %s22, 0
          %s235 = sadd.s32 %s234, %s232
          %s236 = scalar_lea.vmem %s1, %s235
        $region40: #{_device_forward.2} parent=35 // pred_fallthru
          _
      $region36: #{_device_forward.2} parent=5 // pred_fallthru
        _
    $region6: #{_device_forward.2} parent=1 // loop_footer
      %s14 = sadd.s32 1, %s10
    $region7: #{_device_forward.2} parent=1 // loop_footer_branch
      %9 = sbr.rel target = $region3
    $region8: #{_device_forward.2} parent=1 // loop_exit
      _
    %237 = vsyncpa [#allocation3], 1
    %s238 = scalar_lea.sflag [#allocation3], 1
    %239 = vsyncpa %s238, 1

// kernel: _device_forward.3
$region0: #{_device_forward.3}
  #allocation0 [shape = 'u32[]', space=smem, size = 0x4, offset = 0x4, fixed_abs, tag = 'smem constant byte address 0x4 - core index']
  #allocation1 [shape = 'u32[144,128]{1,0:T(1,128)}', space=vmem, size = 0x12000, scoped, tag = 'internal scratch']
  %s0 = inlined_call_operand.vmem [shape: f32[2,1,16], index: 0, kind: input, shape index: {}]
  %s1 = inlined_call_operand.vmem [shape: f32[2,16,128], index: 1, kind: input, shape index: {}]
  %s2 = inlined_call_operand.hbm [shape: f32[2,16,128], index: 2, kind: output, shape index: {}]
  %s3 = sld [smem:[#allocation0]]
  $region41: #{_device_forward.3} parent=0
    _
  %s5 = ssub.s32 1, %s3
  %s6 = scalar_select 0, %s5, %s3
  $region1: #{_device_forward.3} parent=0
    #allocation2 [shape = 'u8[16384]{0}', space=vmem, size = 0x4000, scoped, tag = 'output window, operand 0']
    #allocation3 [shape = 's32[2]{0}', space=sflag, size = 0x8, scoped, tag = 'scoped memory for _device_forward.3']
    %7 = vsyncpa [#allocation3], 0
    %s8 = scalar_lea.sflag [#allocation3], 1
    %9 = vsyncpa %s8, 0
    loop: start=0, step=1, limit=4
    $region2: #{_device_forward.3} parent=1 // loop_pre_header
      _
    $region3: #{_device_forward.3} parent=1 // loop_header
      %s11 = sphi 0, %s15
      %p12 = scmp.ge.s32.totalorder %s11, 4
      %s18 = sphi 0, %s30
      %s19 = sphi 0, %s26
      %s20 = sphi 0, %s18
      %s21 = sphi 0, %s19
      %s22 = sphi 0, %s20
      %s23 = sphi 0, %s21
      %s35 = sphi 0, %s37
      %s38 = sphi 0, %s35
      %s39 = sphi 0, %s38
      %s55 = sphi 0, %s39
      %s63 = sphi 0, %s65
      %s66 = sphi 0, %s63
      %s67 = sphi 0, %s66
      %s83 = sphi 0, %s67
      %s91 = sphi 0, %s93
      %s94 = sphi 0, %s91
      %s95 = sphi 0, %s94
      %s111 = sphi 0, %s95
    $region4: #{_device_forward.3} parent=1 // loop_header_branch
      %14 = sbr.rel (%p12) target = $region8
    $region5: #{_device_forward.3} parent=1 // loop_body
      %s16 = ssub.s32 %s11, 1
      %s17 = ssub.s32 %s11, 2
      %s24 = sadd.s32 1, %s19
      %p25 = scmp.ge.s32.totalorder %s24, 1
      %s26 = scalar_select %p25, 0, %s24
      %s27 = sadd.s32 1, %s18
      %s28 = scalar_select %p25, %s27, %s18
      %p29 = scmp.ge.s32.totalorder %s28, 2
      %s30 = scalar_select %p29, 0, %s28
      %s31 = ssub.s32 %s18, %s30
      %s32 = ssub.s32 %s19, %s26
      %s33 = sor.u32 %s31, %s32
      %p34 = scmp.eq.s32.totalorder %s33, 0
      %s36 = sadd.s32 %s35, 1
      %s37 = scalar_select %p34, %s35, %s36
      %p40 = pneg %p34
      %p41 = scmp.eq.s32.totalorder %s11, 1
      %p42 = por %p40, %p41
      %p43 = scmp.ne.s32.totalorder %s35, %s38
      %p44 = scmp.eq.s32.totalorder %s11, 0
      %p45 = por %p43, %p44
      %p46 = scmp.ne.s32.totalorder %s35, %s38
      %p47 = scmp.eq.s32.totalorder %s16, 1
      %p48 = por %p46, %p47
      %p49 = scmp.ne.s32.totalorder %s38, %s39
      %p50 = scmp.eq.s32.totalorder %s16, 0
      %p51 = por %p49, %p50
      %p52 = scmp.ne.s32.totalorder %s38, %s39
      %p53 = scmp.eq.s32.totalorder %s17, 1
      %p54 = por %p52, %p53
      %p56 = scmp.ne.s32.totalorder %s39, %s55
      %p57 = scmp.eq.s32.totalorder %s17, 0
      %p58 = por %p56, %p57
      %s59 = ssub.s32 %s18, %s30
      %s60 = ssub.s32 %s19, %s26
      %s61 = sor.u32 %s59, %s60
      %p62 = scmp.eq.s32.totalorder %s61, 0
      %s64 = sadd.s32 %s63, 1
      %s65 = scalar_select %p62, %s63, %s64
      %p68 = pneg %p62
      %p69 = scmp.eq.s32.totalorder %s11, 1
      %p70 = por %p68, %p69
      %p71 = scmp.ne.s32.totalorder %s63, %s66
      %p72 = scmp.eq.s32.totalorder %s11, 0
      %p73 = por %p71, %p72
      %p74 = scmp.ne.s32.totalorder %s63, %s66
      %p75 = scmp.eq.s32.totalorder %s16, 1
      %p76 = por %p74, %p75
      %p77 = scmp.ne.s32.totalorder %s66, %s67
      %p78 = scmp.eq.s32.totalorder %s16, 0
      %p79 = por %p77, %p78
      %p80 = scmp.ne.s32.totalorder %s66, %s67
      %p81 = scmp.eq.s32.totalorder %s17, 1
      %p82 = por %p80, %p81
      %p84 = scmp.ne.s32.totalorder %s67, %s83
      %p85 = scmp.eq.s32.totalorder %s17, 0
      %p86 = por %p84, %p85
      %s87 = ssub.s32 %s18, %s30
      %s88 = ssub.s32 %s19, %s26
      %s89 = sor.u32 %s87, %s88
      %p90 = scmp.eq.s32.totalorder %s89, 0
      %s92 = sadd.s32 %s91, 1
      %s93 = scalar_select %p90, %s91, %s92
      %p96 = pneg %p90
      %p97 = scmp.eq.s32.totalorder %s11, 1
      %p98 = por %p96, %p97
      %p99 = scmp.ne.s32.totalorder %s91, %s94
      %p100 = scmp.eq.s32.totalorder %s11, 0
      %p101 = por %p99, %p100
      %p102 = scmp.ne.s32.totalorder %s91, %s94
      %p103 = scmp.eq.s32.totalorder %s16, 1
      %p104 = por %p102, %p103
      %p105 = scmp.ne.s32.totalorder %s94, %s95
      %p106 = scmp.eq.s32.totalorder %s16, 0
      %p107 = por %p105, %p106
      %p108 = scmp.ne.s32.totalorder %s94, %s95
      %p109 = scmp.eq.s32.totalorder %s17, 1
      %p110 = por %p108, %p109
      %p112 = scmp.ne.s32.totalorder %s95, %s111
      %p113 = scmp.eq.s32.totalorder %s17, 0
      %p114 = por %p112, %p113
      %p115 = scmp.le.s32.totalorder 1, %s11
      %p116 = scmp.lt.s32.totalorder %s11, 3
      %p117 = pnand %p115, %p116
      %p118 = pneg %p117
      // Predicated region
      $region9: #{_device_forward.3} parent=5 // pred_check
        _
      $region10: #{_device_forward.3} parent=5 // pred_check_branch
        %120 = sbr.rel (%p117) target = $region12
      $region11: #{_device_forward.3} parent=5 // pred_region
        %s121 = ssub.s32 %s11, 1
      $region12: #{_device_forward.3} parent=5 // pred_fallthru
        _
      %p122 = scmp.lt.s32.totalorder %s11, 2
      // Predicated region
      $region13: #{_device_forward.3} parent=5 // pred_check
        %p123 = pneg %p122
      $region14: #{_device_forward.3} parent=5 // pred_check_branch
        %125 = sbr.rel (%p123) target = $region16
      $region15: #{_device_forward.3} parent=5 // pred_region
        // Predicated region
        $region17: #{_device_forward.3} parent=15 // pred_check
          %p126 = pneg %p45
        $region18: #{_device_forward.3} parent=15 // pred_check_branch
          %128 = sbr.rel (%p126) target = $region20
        $region19: #{_device_forward.3} parent=15 // pred_region
          %p129 = scmp.lt.s32.totalorder %s18, 1
          %s130 = scalar_select %p129, %s18, 1
          %p131 = scmp.lt.s32.totalorder %s19, 0
          %s132 = scalar_select %p131, %s19, 0
          %s133 = sadd.s32 %s132, %s130
          %s134 = scalar_lea.vmem %s0, %s133
        $region20: #{_device_forward.3} parent=15 // pred_fallthru
          _
        // Predicated region
        $region21: #{_device_forward.3} parent=15 // pred_check
          %p135 = pneg %p73
        $region22: #{_device_forward.3} parent=15 // pred_check_branch
          %137 = sbr.rel (%p135) target = $region24
        $region23: #{_device_forward.3} parent=15 // pred_region
          %s138 = smul.u32 2, %s19
          %p139 = scmp.lt.s32.totalorder %s18, 1
          %s140 = scalar_select %p139, %s18, 1
          %p141 = scmp.lt.s32.totalorder %s138, 1
          %s142 = scalar_select %p141, %s138, 1
          %s143 = smul.addr %s140, 2
          %s144 = sadd.s32 %s142, %s143
          %s145 = smul.addr %s144, 8
          %s146 = scalar_lea.vmem %s1, %s145
          %s147 = smul.u32 2, %s19
        $region24: #{_device_forward.3} parent=15 // pred_fallthru
          _
      $region16: #{_device_forward.3} parent=5 // pred_fallthru
        _
      %p148 = scmp.le.s32.totalorder 1, %s11
      %p149 = scmp.lt.s32.totalorder %s11, 3
      %p150 = pnand %p148, %p149
      %p151 = pneg %p150
      // Predicated region
      $region25: #{_device_forward.3} parent=5 // pred_check
        _
      $region26: #{_device_forward.3} parent=5 // pred_check_branch
        %153 = sbr.rel (%p150) target = $region28
      $region27: #{_device_forward.3} parent=5 // pred_region
        %s154 = ssub.s32 %s11, 1
        %p155 = scmp.lt.s32.totalorder %s20, 1
        %s156 = scalar_select %p155, %s20, 1
        %p157 = scmp.lt.s32.totalorder %s21, 0
        %s158 = scalar_select %p157, %s21, 0
        %s159 = sadd.s32 %s158, %s156
        %s160 = scalar_lea.vmem %s0, %s159
        %p161 = pneg %p51
        %p162 = pneg %p48
        %s163 = smul.u32 2, %s21
        %p164 = scmp.lt.s32.totalorder %s20, 1
        %s165 = scalar_select %p164, %s20, 1
        %p166 = scmp.lt.s32.totalorder %s163, 1
        %s167 = scalar_select %p166, %s163, 1
        %s168 = smul.addr %s165, 2
        %s169 = sadd.s32 %s167, %s168
        %s170 = smul.addr %s169, 8
        %s171 = scalar_lea.vmem %s1, %s170
        %p172 = pneg %p79
        %p173 = pneg %p76
        %p174 = pneg %p107
        %p175 = pneg %p104
        %s176 = sand.u32 %s94, 1
        %s177 = scalar_lea.sflag [#allocation3], %s176
        %s178 = sand.u32 %s94, 1
        %s179 = smul.addr %s178, 16
        %s180 = scalar_lea.vmem [#allocation2], %s179
        %p181 = scmp.lt.s32.totalorder %s20, 1
        %s182 = scalar_select %p181, %s20, 1
        %p183 = scmp.lt.s32.totalorder %s21, 0
        %s184 = scalar_select %p183, %s21, 0
        %s185 = sadd.s32 %s184, %s182
        %s186 = scalar_lea.vmem %s0, %s185
        %s187 = smul.u32 2, %s21
        %p188 = scmp.lt.s32.totalorder %s20, 1
        %s189 = scalar_select %p188, %s20, 1
        %p190 = scmp.lt.s32.totalorder %s187, 1
        %s191 = scalar_select %p190, %s187, 1
        %s192 = smul.addr %s189, 2
        %s193 = sadd.s32 %s191, %s192
        %s194 = smul.addr %s193, 8
        %s195 = scalar_lea.vmem %s1, %s194
        %s196 = smul.u32 2, %s21
        %s197 = smul.u32 2, %s21
        %v198 = vld [vmem:[%s186] sm:$0x1]
        %199 = vxpose.xlu0.b32.start [1/16] %v198, 128
        %200 = vxpose.xlu0.b32.cont [2/16] 0.0, 128
        %201 = vxpose.xlu0.b32.cont [3/16] 0.0, 128
        %202 = vxpose.xlu0.b32.cont [4/16] 0.0, 128
        %203 = vxpose.xlu0.b32.cont [5/16] 0.0, 128
        %204 = vxpose.xlu0.b32.cont [6/16] 0.0, 128
        %205 = vxpose.xlu0.b32.cont [7/16] 0.0, 128
        %206 = vxpose.xlu0.b32.cont [8/16] 0.0, 128
        %207 = vxpose.xlu0.b32.cont [9/16] 0.0, 128
        %208 = vxpose.xlu0.b32.cont [10/16] 0.0, 128
        %209 = vxpose.xlu0.b32.cont [11/16] 0.0, 128
        %210 = vxpose.xlu0.b32.cont [12/16] 0.0, 128
        %211 = vxpose.xlu0.b32.cont [13/16] 0.0, 128
        %212 = vxpose.xlu0.b32.cont [14/16] 0.0, 128
        %213 = vxpose.xlu0.b32.cont [15/16] 0.0, 128
        %214 = vxpose.xlu0.b32.end [16/16] 0.0, 128
        %v215 = vpop.trf.xlu0
        %v216 = vpop.trf.xlu0
        %v217 = vpop.trf.xlu0
        %v218 = vpop.trf.xlu0
        %v219 = vpop.trf.xlu0
        %v220 = vpop.trf.xlu0
        %v221 = vpop.trf.xlu0
        %v222 = vpop.trf.xlu0
        %v223 = vpop.trf.xlu0
        %v224 = vpop.trf.xlu0
        %v225 = vpop.trf.xlu0
        %v226 = vpop.trf.xlu0
        %v227 = vpop.trf.xlu0
        %v228 = vpop.trf.xlu0
        %v229 = vpop.trf.xlu0
        %v230 = vpop.trf.xlu0
        %v231 = vld [vmem:[%s195] sm:$0xff]
        %v232 = vld [vmem:[%s195 + $0x8] sm:$0xff]
        %234 = vset.pattern.permute.xlu0 0
        %235 = vperm.xlu0 %234, %v215
        %v236 = vpop.permute.xlu0 %235
        %239 = vset.pattern.permute.xlu0 0
        %240 = vperm.xlu0 %239, %v216
        %v241 = vpop.permute.xlu0 %240
        %v243 = vmul.f32 %v231, %v236
        %v244 = vmul.f32 %v232, %v241
        %245 = vst [vmem:[%s180] sm:$0xff] %v243
        %246 = vst [vmem:[%s180 + $0x8] sm:$0xff] %v244
        %s247 = sand.u32 %s94, 1
        %s248 = scalar_lea.sflag [#allocation3], %s247
        %s249 = sand.u32 %s94, 1
        %s250 = smul.addr %s249, 16
        %s251 = scalar_lea.vmem [#allocation2], %s250
        // Predicated region
        $region29: #{_device_forward.3} parent=27 // pred_check
          %p252 = pneg %p104
        $region30: #{_device_forward.3} parent=27 // pred_check_branch
          %254 = sbr.rel (%p252) target = $region32
        $region31: #{_device_forward.3} parent=27 // pred_region
          %s255 = smul.u32 2, %s21
          %s257 = ssub.s32 256, 256
          %258 = vsyncadd %s248, %s257
          %s259 = smul.addr %s20, 2
          %s260 = sadd.s32 %s255, %s259
          %s261 = smul.addr %s260, 128
          %s262 = scalar_lea.hbm %s2, %s261
          %s263 = sshll.u32 %s251, 4
          %s264 = int_to_ptr.vmem [resolvable:$true] %s263
          %269 = dma.vmem_to_hbm [thread:$0]  %s264, 256, %s262, %s248, 128, 128, 8
        $region32: #{_device_forward.3} parent=27 // pred_fallthru
          _
      $region28: #{_device_forward.3} parent=5 // pred_fallthru
        _
      %p270 = scmp.le.s32.totalorder 2, %s11
      // Predicated region
      $region33: #{_device_forward.3} parent=5 // pred_check
        %p271 = pneg %p270
      $region34: #{_device_forward.3} parent=5 // pred_check_branch
        %273 = sbr.rel (%p271) target = $region36
      $region35: #{_device_forward.3} parent=5 // pred_region
        %s274 = ssub.s32 %s11, 2
        // Predicated region
        $region37: #{_device_forward.3} parent=35 // pred_check
          %p275 = pneg %p110
        $region38: #{_device_forward.3} parent=35 // pred_check_branch
          %277 = sbr.rel (%p275) target = $region40
        $region39: #{_device_forward.3} parent=35 // pred_region
          %s278 = sand.u32 %s95, 1
          %s279 = scalar_lea.sflag [#allocation3], %s278
          %s280 = sand.u32 %s95, 1
          %s281 = smul.addr %s280, 16
          %s282 = scalar_lea.vmem [#allocation2], %s281
          %283 = dma.done %s279, 256
        $region40: #{_device_forward.3} parent=35 // pred_fallthru
          _
      $region36: #{_device_forward.3} parent=5 // pred_fallthru
        _
    $region6: #{_device_forward.3} parent=1 // loop_footer
      %s15 = sadd.s32 1, %s11
    $region7: #{_device_forward.3} parent=1 // loop_footer_branch
      %10 = sbr.rel target = $region3
    $region8: #{_device_forward.3} parent=1 // loop_exit
      _
    %284 = vsyncpa [#allocation3], 1
    %s285 = scalar_lea.sflag [#allocation3], 1
    %286 = vsyncpa %s285, 1

</llo_original>
